<compile_context>
chip_gen: v5e
topology: v5e:2x2
jax: 0.10.0
libtpu: 0.0.40
codegen_flags: <defaults>
</compile_context>

<pallas_src>
import math

import jax
import jax.numpy as jnp
from jax.experimental import pallas as pl
from jax.experimental.pallas import tpu as pltpu


def _round_up(x, m):
    return (x + m - 1) // m * m


def _vmem_limit_bytes():
    """Generation-aware VMEM cap: half of physical (64 MiB on v5e/v6e, 32 MiB on v7x)."""
    try:
        cap = int(pltpu.get_tpu_info().vmem_capacity_bytes)
    except Exception:
        cap = 64 * 1024 * 1024          # conservative fallback (v7x per-TC physical VMEM)
    return int(min(cap // 2, 96 * 1024 * 1024))


def _pick_tk(dpad, tk_max):
    """Largest multiple of 128 that divides `dpad` and is <= tk_max.

    Guarantees the K grid covers exactly [0, dpad): no zero columns beyond the
    one-time 128-alignment pad of the folded weights are DMA'd or multiplied,
    and small shapes collapse to a single grid step.
    """
    if dpad <= tk_max:
        return dpad
    m = dpad // 128
    best = 1
    d = 1
    while d * d <= m:
        if m % d == 0:
            for cand in (d, m // d):
                if cand * 128 <= tk_max and cand > best:
                    best = cand
        d += 1
    return best * 128


def ensemble_kernel(x_ref, w_ref, b_ref, o_ref):
    k = pl.program_id(1)

    @pl.when(k == 0)
    def _():
        # The f32 output block is resident across the K axis (its index_map ignores k);
        # seed it with the pre-averaged bias -> no scratch accumulator, no epilogue.
        o_ref[...] = jnp.broadcast_to(b_ref[...], o_ref.shape)

    # Activations arrive as f32 straight from the caller's array (no extra HBM
    # pass); cast to bf16 in VMEM so the dot takes the fast bf16 MXU path with
    # f32 accumulation.
    o_ref[...] += jnp.dot(x_ref[...].astype(jnp.bfloat16), w_ref[...],
                          preferred_element_type=jnp.float32)


def prepare_ensemble_params(w1, b1, w2, b2):
    """One-time ensemble fold, hoisted out of the per-call path.

    (x@w1 + b1 + x@w2 + b2)/2 == x @ ((w1+w2)/2) + (b1+b2)/2 — valid because both
    submodels are Linear heads.  Weights are averaged, cast to bf16 and K-padded
    to a multiple of 128 exactly once; reuse the result across forward calls.
    """
    D, N = w1.shape
    dpad = _round_up(D, 128)
    w_avg = ((w1 + w2) * 0.5).astype(jnp.bfloat16)
    if dpad != D:
        w_avg = jnp.zeros((dpad, N), jnp.bfloat16).at[:D, :].set(w_avg)
    b_avg = ((b1 + b2) * 0.5).astype(jnp.float32).reshape(1, N)
    return w_avg, b_avg


def ensemble_forward(x, w_folded, b_folded):
    """x: [B, ...] f32 (flattened per-row); w_folded: [Dpad, N] bf16; b_folded: [1, N] f32."""
    B = x.shape[0]
    D = math.prod(x.shape[1:])
    dpad, N = w_folded.shape

    x2d = x.reshape(B, D).astype(jnp.float32)       # row-major flatten (== torch .view)
    if dpad != D:
        # K padding must match the zero-padded folded weights (reduction stays exact).
        x2d = jnp.zeros((B, dpad), jnp.float32).at[:, :D].set(x2d)

    # Batch tiling: one full-B tile for small batches (no padding, no extra HBM
    # pass over x); fixed tiles + a "parallel" grid axis for large batches so
    # v7x's two TensorCores can split the work.
    if B <= 256:
        tb, bpad = B, B
    else:
        tb = 256
        bpad = _round_up(B, tb)
        x2d = jnp.zeros((bpad, dpad), jnp.float32).at[:B, :].set(x2d)
    n_b = bpad // tb

    vmem_limit = _vmem_limit_bytes()
    # Double-buffered input tiles (f32 x + bf16 w) per K column, plus the resident
    # output/bias; keep the working set within ~60% of the generation's VMEM cap.
    per_k_bytes = 2 * (tb * 4 + N * 2)
    fixed_bytes = 2 * (tb * N * 4 + N * 4)
    tk_max = max(128, (int(vmem_limit * 0.6) - fixed_bytes) // per_k_bytes)
    tk = _pick_tk(dpad, tk_max)
    n_k = dpad // tk

    flops = 2 * bpad * dpad * N
    bytes_accessed = bpad * dpad * 4 + dpad * N * 2 + N * 4 + bpad * N * 4

    out = pl.pallas_call(
        ensemble_kernel,
        out_shape=jax.ShapeDtypeStruct((bpad, N), jnp.float32),
        grid_spec=pltpu.PrefetchScalarGridSpec(
            num_scalar_prefetch=0,
            grid=(n_b, n_k),                                    # K (reduction) last
            in_specs=[
                pl.BlockSpec((tb, tk), lambda b, k: (b, k)),    # activations (f32)
                pl.BlockSpec((tk, N), lambda b, k: (k, 0)),     # folded weight (bf16)
                pl.BlockSpec((1, N), lambda b, k: (0, 0)),      # folded bias (f32)
            ],
            out_specs=pl.BlockSpec((tb, N), lambda b, k: (b, 0)),
        ),
        compiler_params=pltpu.CompilerParams(
            dimension_semantics=("parallel", "arbitrary"),
            vmem_limit_bytes=vmem_limit,
        ),
        cost_estimate=pl.CostEstimate(
            flops=int(flops), transcendentals=0, bytes_accessed=int(bytes_accessed)),
    )(x2d, w_folded, b_folded)

    return out[:B]


if __name__ == "__main__":
    # Small shapes consistent with the module: batch=2, channels=4, spatial=16.
    B, C, H, W = 2, 4, 16, 16
    NUM_CLASSES = 32
    D = C * H * W

    key = jax.random.PRNGKey(0)
    kx, kw1, kb1, kw2, kb2 = jax.random.split(key, 5)

    x = jax.random.normal(kx, (B, C, H, W), dtype=jnp.float32)
    # Deterministic synthetic parameters for the two submodels.
    w1 = jax.random.normal(kw1, (D, NUM_CLASSES), dtype=jnp.float32) * 0.02
    b1 = jax.random.normal(kb1, (NUM_CLASSES,), dtype=jnp.float32) * 0.02
    w2 = jax.random.normal(kw2, (D, NUM_CLASSES), dtype=jnp.float32) * 0.02
    b2 = jax.random.normal(kb2, (NUM_CLASSES,), dtype=jnp.float32) * 0.02

    # One-time fold of the ensemble parameters (reused across all forward calls).
    w_f, b_f = prepare_ensemble_params(w1, b1, w2, b2)

    out = jax.block_until_ready(ensemble_forward(x, w_f, b_f))
    assert out.shape == (B, NUM_CLASSES)

    x2d = x.reshape(B, D)

    # Reference check vs. the exact f32 two-matmul path (loose tolerance: the kernel
    # uses bf16 inputs/weights with f32 accumulation).
    ref_exact = ((x2d @ w1 + b1) + (x2d @ w2 + b2)) / 2.0
    assert jnp.allclose(out, ref_exact, atol=2e-2, rtol=2e-2), (
        float(jnp.max(jnp.abs(out - ref_exact))))

    # Tighter check vs. a precision-matched reference (bf16 operands, f32 accumulate).
    w_avg_bf16 = ((w1 + w2) * 0.5).astype(jnp.bfloat16)
    ref_bf16 = jnp.dot(x2d.astype(jnp.bfloat16), w_avg_bf16,
                       preferred_element_type=jnp.float32) + (b1 + b2) * 0.5
    assert jnp.allclose(out, ref_bf16, atol=1e-3, rtol=1e-3), (
        float(jnp.max(jnp.abs(out - ref_bf16))))

    print("KERNEL_OK")
</pallas_src>

<mosaic_0001>
module attributes {stable_mosaic.version = 11 : i64} {
  func.func @ensemble_kernel(%arg0: i32, %arg1: i32, %arg2: memref<2x1024xf32, #tpu.memory_space<vmem>>, %arg3: memref<1024x32xbf16, #tpu.memory_space<vmem>>, %arg4: memref<1x32xf32, #tpu.memory_space<vmem>>, %arg5: memref<2x32xf32, #tpu.memory_space<vmem>>) attributes {dimension_semantics = [#tpu.dimension_semantics<parallel>, #tpu.dimension_semantics<arbitrary>], iteration_bounds = array<i64: 1, 1>, scalar_prefetch = 0 : i64, scratch_operands = 0 : i64, tpu.core_type = #tpu.core_type<tc>, window_params = [{transform_indices = @transform_0, window_bounds = array<i64: 2, 1024>}, {transform_indices = @transform_1, window_bounds = array<i64: 1024, 32>}, {pipeline_mode = #tpu.pipeline_mode<synchronous>, transform_indices = @transform_2, window_bounds = array<i64: 1, 32>}, {transform_indices = @transform_3, window_bounds = array<i64: 2, 32>}]} {
    %c0_i32 = arith.constant 0 : i32
    %0 = arith.cmpi eq, %arg1, %c0_i32 : i32
    %1 = arith.extui %0 : i1 to i32
    %c0_i32_0 = arith.constant 0 : i32
    %2 = arith.cmpi ne, %1, %c0_i32_0 : i32
    scf.if %2 {
      %c0_8 = arith.constant 0 : index
      %c0_9 = arith.constant 0 : index
      %10 = vector.load %arg4[%c0_8, %c0_9] : memref<1x32xf32, #tpu.memory_space<vmem>>, vector<1x32xf32>
      %11 = vector.shape_cast %10 : vector<1x32xf32> to vector<1x32xf32>
      %12 = vector.broadcast %11 : vector<1x32xf32> to vector<2x32xf32>
      %c0_10 = arith.constant 0 : index
      %c0_11 = arith.constant 0 : index
      %13 = vector.load %arg5[%c0_10, %c0_11] : memref<2x32xf32, #tpu.memory_space<vmem>>, vector<2x32xf32>
      tpu.vector_store %arg5[%c0_10, %c0_11], %12 {strides = array<i32>} : memref<2x32xf32, #tpu.memory_space<vmem>>, vector<2x32xf32>,
    } else {
    }
    %c0 = arith.constant 0 : index
    %c0_1 = arith.constant 0 : index
    %3 = vector.load %arg5[%c0, %c0_1] : memref<2x32xf32, #tpu.memory_space<vmem>>, vector<2x32xf32>
    %c0_2 = arith.constant 0 : index
    %c0_3 = arith.constant 0 : index
    %4 = vector.load %arg2[%c0_2, %c0_3] : memref<2x1024xf32, #tpu.memory_space<vmem>>, vector<2x1024xf32>
    %5 = arith.truncf %4 : vector<2x1024xf32> to vector<2x1024xbf16>
    %c0_4 = arith.constant 0 : index
    %c0_5 = arith.constant 0 : index
    %6 = vector.load %arg3[%c0_4, %c0_5] : memref<1024x32xbf16, #tpu.memory_space<vmem>>, vector<1024x32xbf16>
    %cst = arith.constant dense<0.000000e+00> : vector<2x32xf32>
    %7 = tpu.matmul %5, %6, %cst {dimension_numbers = #tpu.dot_dimension_numbers<[1], [0], [0], [1], [0, 0, 1, 1], [], []>} : vector<2x1024xbf16>, vector<1024x32xbf16>, vector<2x32xf32> -> vector<2x32xf32>
    %8 = arith.addf %3, %7 : vector<2x32xf32>
    %c0_6 = arith.constant 0 : index
    %c0_7 = arith.constant 0 : index
    %9 = vector.load %arg5[%c0_6, %c0_7] : memref<2x32xf32, #tpu.memory_space<vmem>>, vector<2x32xf32>
    tpu.vector_store %arg5[%c0_6, %c0_7], %8 {strides = array<i32>} : memref<2x32xf32, #tpu.memory_space<vmem>>, vector<2x32xf32>,
    return
  }
  func.func @transform_0(%arg0: i32, %arg1: i32) -> (i32, i32) {
    %c0_i32 = arith.constant 0 : i32
    return %arg0, %arg1 : i32, i32
  }
  func.func @transform_1(%arg0: i32, %arg1: i32) -> (i32, i32) {
    %c0_i32 = arith.constant 0 : i32
    %c0_i32_0 = arith.constant 0 : i32
    return %arg1, %c0_i32 : i32, i32
  }
  func.func @transform_2(%arg0: i32, %arg1: i32) -> (i32, i32) {
    %c0_i32 = arith.constant 0 : i32
    %c0_i32_0 = arith.constant 0 : i32
    %c0_i32_1 = arith.constant 0 : i32
    return %c0_i32, %c0_i32_0 : i32, i32
  }
  func.func @transform_3(%arg0: i32, %arg1: i32) -> (i32, i32) {
    %c0_i32 = arith.constant 0 : i32
    %c0_i32_0 = arith.constant 0 : i32
    return %arg0, %c0_i32 : i32, i32
  }
}

</mosaic_0001>

<llo_original>
// kernel: tpu_custom_call.1
$region0: #{tpu_custom_call.1}
  #allocation0 [shape = 'u32[]', space=smem, size = 0x4, offset = 0x4, fixed_abs, tag = 'smem constant byte address 0x4 - core index']
  #allocation1 [shape = 'u32[72,128]{1,0:T(1,128)}', space=vmem, size = 0x9000, scoped, tag = 'internal scratch']
  %s0 = inlined_call_operand.vmem [shape: f32[2,1024], index: 0, kind: input, shape index: {}]
  %s1 = inlined_call_operand.vmem [shape: bf16[1024,32], index: 1, kind: input, shape index: {}]
  %s2 = inlined_call_operand.vmem [shape: f32[1,32], index: 2, kind: input, shape index: {}]
  %s3 = inlined_call_operand.hbm [shape: f32[2,32], index: 3, kind: output, shape index: {}]
  %s4 = sld [smem:[#allocation0]]
  $region26: #{tpu_custom_call.1} parent=0
    _
  %s6 = ssub.s32 1, %s4
  %s7 = scalar_select 0, %s6, %s4
  $region1: #{tpu_custom_call.1} parent=0
    #allocation2 [shape = 'u8[1024]{0}', space=vmem, size = 0x400, scoped, tag = 'output window, operand 0, single buffered']
    #allocation3 [shape = 's32[1]{0}', space=sflag, size = 0x4, scoped, tag = 'scoped memory for tpu_custom_call.1']
    %8 = vsyncpa [#allocation3], 0
    // Predicated region
    $region2: #{tpu_custom_call.1} parent=1 // pred_check
      _
    $region3: #{tpu_custom_call.1} parent=1 // pred_check_branch
      %10 = sbr.rel (0) target = $region5
    $region4: #{tpu_custom_call.1} parent=1 // pred_region
      _
    $region5: #{tpu_custom_call.1} parent=1 // pred_fallthru
      _
    // Predicated region
    $region6: #{tpu_custom_call.1} parent=1 // pred_check
      _
    $region7: #{tpu_custom_call.1} parent=1 // pred_check_branch
      %12 = sbr.rel (0) target = $region9
    $region8: #{tpu_custom_call.1} parent=1 // pred_region
      _
    $region9: #{tpu_custom_call.1} parent=1 // pred_fallthru
      _
    // Predicated region
    $region10: #{tpu_custom_call.1} parent=1 // pred_check
      _
    $region11: #{tpu_custom_call.1} parent=1 // pred_check_branch
      %14 = sbr.rel (0) target = $region13
    $region12: #{tpu_custom_call.1} parent=1 // pred_region
      _
    $region13: #{tpu_custom_call.1} parent=1 // pred_fallthru
      _
    %p15 = scmp.eq.s32.totalorder 0, 0
    // Predicated region
    $region14: #{tpu_custom_call.1} parent=1 // pred_check
      %p16 = pneg %p15
    $region15: #{tpu_custom_call.1} parent=1 // pred_check_branch
      %18 = sbr.rel (%p16) target = $region17
    $region16: #{tpu_custom_call.1} parent=1 // pred_region
      %v19 = vld [vmem:[%s2] sm:$0x1]
      %v21 = vperm.slane %v19, 0
      %vm23 = vcmask 254976
      %24 = vst.msk [vmem:[#allocation2] sm:$0x3] %vm23, %v21
    $region17: #{tpu_custom_call.1} parent=1 // pred_fallthru
      _
    %v25 = vld [vmem:[#allocation2] sm:$0x3]
    %v26 = vld [vmem:[%s0] sm:$0xff]
    %v27 = vld [vmem:[%s0 + $0x8] sm:$0xff]
    %30 = vst [vmem:[#allocation1] ss:$4 sm:$0xff] %v26
    %s31 = scalar_lea.vmem [#allocation1], 32
    %32 = vst [vmem:[%s31] ss:$4 sm:$0xff] %v27
    %v33 = vld.sshfl [vmem:[#allocation1] sm:$0xff pattern:$0x73625140]
    %v34 = vld.sshfl [vmem:[#allocation1 + $0x8] sm:$0xff pattern:$0x73625140]
    %v35 = vld.sshfl [vmem:[#allocation1 + $0x10] sm:$0xff pattern:$0x73625140]
    %v36 = vld.sshfl [vmem:[#allocation1 + $0x18] sm:$0xff pattern:$0x73625140]
    %v37 = vld.sshfl [vmem:[#allocation1 + $0x20] sm:$0xff pattern:$0x73625140]
    %v38 = vld.sshfl [vmem:[#allocation1 + $0x28] sm:$0xff pattern:$0x73625140]
    %v39 = vld.sshfl [vmem:[#allocation1 + $0x30] sm:$0xff pattern:$0x73625140]
    %v40 = vld.sshfl [vmem:[#allocation1 + $0x38] sm:$0xff pattern:$0x73625140]
    %v49 = vpack.c.bf16 %v33, %v33
    %v50 = vpack.c.bf16 %v34, %v34
    %v51 = vpack.c.bf16 %v35, %v35
    %v52 = vpack.c.bf16 %v36, %v36
    %v53 = vpack.c.bf16 %v37, %v37
    %v54 = vpack.c.bf16 %v38, %v38
    %v55 = vpack.c.bf16 %v39, %v39
    %v56 = vpack.c.bf16 %v40, %v40
    %v57 = vld [vmem:[%s1] sm:$0xf]
    %v58 = vld [vmem:[%s1 + $0x4] sm:$0xf]
    %v59 = vld [vmem:[%s1 + $0x8] sm:$0xf]
    %v60 = vld [vmem:[%s1 + $0xc] sm:$0xf]
    %v61 = vld [vmem:[%s1 + $0x10] sm:$0xf]
    %v62 = vld [vmem:[%s1 + $0x14] sm:$0xf]
    %v63 = vld [vmem:[%s1 + $0x18] sm:$0xf]
    %v64 = vld [vmem:[%s1 + $0x1c] sm:$0xf]
    %v65 = vld [vmem:[%s1 + $0x20] sm:$0xf]
    %v66 = vld [vmem:[%s1 + $0x24] sm:$0xf]
    %v67 = vld [vmem:[%s1 + $0x28] sm:$0xf]
    %v68 = vld [vmem:[%s1 + $0x2c] sm:$0xf]
    %v69 = vld [vmem:[%s1 + $0x30] sm:$0xf]
    %v70 = vld [vmem:[%s1 + $0x34] sm:$0xf]
    %v71 = vld [vmem:[%s1 + $0x38] sm:$0xf]
    %v72 = vld [vmem:[%s1 + $0x3c] sm:$0xf]
    %v73 = vld [vmem:[%s1 + $0x40] sm:$0xf]
    %v74 = vld [vmem:[%s1 + $0x44] sm:$0xf]
    %v75 = vld [vmem:[%s1 + $0x48] sm:$0xf]
    %v76 = vld [vmem:[%s1 + $0x4c] sm:$0xf]
    %v77 = vld [vmem:[%s1 + $0x50] sm:$0xf]
    %v78 = vld [vmem:[%s1 + $0x54] sm:$0xf]
    %v79 = vld [vmem:[%s1 + $0x58] sm:$0xf]
    %v80 = vld [vmem:[%s1 + $0x5c] sm:$0xf]
    %v81 = vld [vmem:[%s1 + $0x60] sm:$0xf]
    %v82 = vld [vmem:[%s1 + $0x64] sm:$0xf]
    %v83 = vld [vmem:[%s1 + $0x68] sm:$0xf]
    %v84 = vld [vmem:[%s1 + $0x6c] sm:$0xf]
    %v85 = vld [vmem:[%s1 + $0x70] sm:$0xf]
    %v86 = vld [vmem:[%s1 + $0x74] sm:$0xf]
    %v87 = vld [vmem:[%s1 + $0x78] sm:$0xf]
    %v88 = vld [vmem:[%s1 + $0x7c] sm:$0xf]
    %v89 = vld [vmem:[%s1 + $0x80] sm:$0xf]
    %v90 = vld [vmem:[%s1 + $0x84] sm:$0xf]
    %v91 = vld [vmem:[%s1 + $0x88] sm:$0xf]
    %v92 = vld [vmem:[%s1 + $0x8c] sm:$0xf]
    %v93 = vld [vmem:[%s1 + $0x90] sm:$0xf]
    %v94 = vld [vmem:[%s1 + $0x94] sm:$0xf]
    %v95 = vld [vmem:[%s1 + $0x98] sm:$0xf]
    %v96 = vld [vmem:[%s1 + $0x9c] sm:$0xf]
    %v97 = vld [vmem:[%s1 + $0xa0] sm:$0xf]
    %v98 = vld [vmem:[%s1 + $0xa4] sm:$0xf]
    %v99 = vld [vmem:[%s1 + $0xa8] sm:$0xf]
    %v100 = vld [vmem:[%s1 + $0xac] sm:$0xf]
    %v101 = vld [vmem:[%s1 + $0xb0] sm:$0xf]
    %v102 = vld [vmem:[%s1 + $0xb4] sm:$0xf]
    %v103 = vld [vmem:[%s1 + $0xb8] sm:$0xf]
    %v104 = vld [vmem:[%s1 + $0xbc] sm:$0xf]
    %v105 = vld [vmem:[%s1 + $0xc0] sm:$0xf]
    %v106 = vld [vmem:[%s1 + $0xc4] sm:$0xf]
    %v107 = vld [vmem:[%s1 + $0xc8] sm:$0xf]
    %v108 = vld [vmem:[%s1 + $0xcc] sm:$0xf]
    %v109 = vld [vmem:[%s1 + $0xd0] sm:$0xf]
    %v110 = vld [vmem:[%s1 + $0xd4] sm:$0xf]
    %v111 = vld [vmem:[%s1 + $0xd8] sm:$0xf]
    %v112 = vld [vmem:[%s1 + $0xdc] sm:$0xf]
    %v113 = vld [vmem:[%s1 + $0xe0] sm:$0xf]
    %v114 = vld [vmem:[%s1 + $0xe4] sm:$0xf]
    %v115 = vld [vmem:[%s1 + $0xe8] sm:$0xf]
    %v116 = vld [vmem:[%s1 + $0xec] sm:$0xf]
    %v117 = vld [vmem:[%s1 + $0xf0] sm:$0xf]
    %v118 = vld [vmem:[%s1 + $0xf4] sm:$0xf]
    %v119 = vld [vmem:[%s1 + $0xf8] sm:$0xf]
    %v120 = vld [vmem:[%s1 + $0xfc] sm:$0xf]
    %v121 = vld [vmem:[%s1 + $0x100] sm:$0xf]
    %v122 = vld [vmem:[%s1 + $0x104] sm:$0xf]
    %v123 = vld [vmem:[%s1 + $0x108] sm:$0xf]
    %v124 = vld [vmem:[%s1 + $0x10c] sm:$0xf]
    %v125 = vld [vmem:[%s1 + $0x110] sm:$0xf]
    %v126 = vld [vmem:[%s1 + $0x114] sm:$0xf]
    %v127 = vld [vmem:[%s1 + $0x118] sm:$0xf]
    %v128 = vld [vmem:[%s1 + $0x11c] sm:$0xf]
    %v129 = vld [vmem:[%s1 + $0x120] sm:$0xf]
    %v130 = vld [vmem:[%s1 + $0x124] sm:$0xf]
    %v131 = vld [vmem:[%s1 + $0x128] sm:$0xf]
    %v132 = vld [vmem:[%s1 + $0x12c] sm:$0xf]
    %v133 = vld [vmem:[%s1 + $0x130] sm:$0xf]
    %v134 = vld [vmem:[%s1 + $0x134] sm:$0xf]
    %v135 = vld [vmem:[%s1 + $0x138] sm:$0xf]
    %v136 = vld [vmem:[%s1 + $0x13c] sm:$0xf]
    %v137 = vld [vmem:[%s1 + $0x140] sm:$0xf]
    %v138 = vld [vmem:[%s1 + $0x144] sm:$0xf]
    %v139 = vld [vmem:[%s1 + $0x148] sm:$0xf]
    %v140 = vld [vmem:[%s1 + $0x14c] sm:$0xf]
    %v141 = vld [vmem:[%s1 + $0x150] sm:$0xf]
    %v142 = vld [vmem:[%s1 + $0x154] sm:$0xf]
    %v143 = vld [vmem:[%s1 + $0x158] sm:$0xf]
    %v144 = vld [vmem:[%s1 + $0x15c] sm:$0xf]
    %v145 = vld [vmem:[%s1 + $0x160] sm:$0xf]
    %v146 = vld [vmem:[%s1 + $0x164] sm:$0xf]
    %v147 = vld [vmem:[%s1 + $0x168] sm:$0xf]
    %v148 = vld [vmem:[%s1 + $0x16c] sm:$0xf]
    %v149 = vld [vmem:[%s1 + $0x170] sm:$0xf]
    %v150 = vld [vmem:[%s1 + $0x174] sm:$0xf]
    %v151 = vld [vmem:[%s1 + $0x178] sm:$0xf]
    %v152 = vld [vmem:[%s1 + $0x17c] sm:$0xf]
    %v153 = vld [vmem:[%s1 + $0x180] sm:$0xf]
    %v154 = vld [vmem:[%s1 + $0x184] sm:$0xf]
    %v155 = vld [vmem:[%s1 + $0x188] sm:$0xf]
    %v156 = vld [vmem:[%s1 + $0x18c] sm:$0xf]
    %v157 = vld [vmem:[%s1 + $0x190] sm:$0xf]
    %v158 = vld [vmem:[%s1 + $0x194] sm:$0xf]
    %v159 = vld [vmem:[%s1 + $0x198] sm:$0xf]
    %v160 = vld [vmem:[%s1 + $0x19c] sm:$0xf]
    %v161 = vld [vmem:[%s1 + $0x1a0] sm:$0xf]
    %v162 = vld [vmem:[%s1 + $0x1a4] sm:$0xf]
    %v163 = vld [vmem:[%s1 + $0x1a8] sm:$0xf]
    %v164 = vld [vmem:[%s1 + $0x1ac] sm:$0xf]
    %v165 = vld [vmem:[%s1 + $0x1b0] sm:$0xf]
    %v166 = vld [vmem:[%s1 + $0x1b4] sm:$0xf]
    %v167 = vld [vmem:[%s1 + $0x1b8] sm:$0xf]
    %v168 = vld [vmem:[%s1 + $0x1bc] sm:$0xf]
    %v169 = vld [vmem:[%s1 + $0x1c0] sm:$0xf]
    %v170 = vld [vmem:[%s1 + $0x1c4] sm:$0xf]
    %v171 = vld [vmem:[%s1 + $0x1c8] sm:$0xf]
    %v172 = vld [vmem:[%s1 + $0x1cc] sm:$0xf]
    %v173 = vld [vmem:[%s1 + $0x1d0] sm:$0xf]
    %v174 = vld [vmem:[%s1 + $0x1d4] sm:$0xf]
    %v175 = vld [vmem:[%s1 + $0x1d8] sm:$0xf]
    %v176 = vld [vmem:[%s1 + $0x1dc] sm:$0xf]
    %v177 = vld [vmem:[%s1 + $0x1e0] sm:$0xf]
    %v178 = vld [vmem:[%s1 + $0x1e4] sm:$0xf]
    %v179 = vld [vmem:[%s1 + $0x1e8] sm:$0xf]
    %v180 = vld [vmem:[%s1 + $0x1ec] sm:$0xf]
    %v181 = vld [vmem:[%s1 + $0x1f0] sm:$0xf]
    %v182 = vld [vmem:[%s1 + $0x1f4] sm:$0xf]
    %v183 = vld [vmem:[%s1 + $0x1f8] sm:$0xf]
    %v184 = vld [vmem:[%s1 + $0x1fc] sm:$0xf]
    %v313 = vunpack.c.l.b16 %v57
    %v314 = vunpack.c.l.b16 %v58
    %v315 = vunpack.c.l.b16 %v59
    %v316 = vunpack.c.l.b16 %v60
    %v317 = vunpack.c.l.b16 %v61
    %v318 = vunpack.c.l.b16 %v62
    %v319 = vunpack.c.l.b16 %v63
    %v320 = vunpack.c.l.b16 %v64
    %v321 = vunpack.c.l.b16 %v65
    %v322 = vunpack.c.l.b16 %v66
    %v323 = vunpack.c.l.b16 %v67
    %v324 = vunpack.c.l.b16 %v68
    %v325 = vunpack.c.l.b16 %v69
    %v326 = vunpack.c.l.b16 %v70
    %v327 = vunpack.c.l.b16 %v71
    %v328 = vunpack.c.l.b16 %v72
    %v329 = vunpack.c.l.b16 %v73
    %v330 = vunpack.c.l.b16 %v74
    %v331 = vunpack.c.l.b16 %v75
    %v332 = vunpack.c.l.b16 %v76
    %v333 = vunpack.c.l.b16 %v77
    %v334 = vunpack.c.l.b16 %v78
    %v335 = vunpack.c.l.b16 %v79
    %v336 = vunpack.c.l.b16 %v80
    %v337 = vunpack.c.l.b16 %v81
    %v338 = vunpack.c.l.b16 %v82
    %v339 = vunpack.c.l.b16 %v83
    %v340 = vunpack.c.l.b16 %v84
    %v341 = vunpack.c.l.b16 %v85
    %v342 = vunpack.c.l.b16 %v86
    %v343 = vunpack.c.l.b16 %v87
    %v344 = vunpack.c.l.b16 %v88
    %v345 = vunpack.c.l.b16 %v89
    %v346 = vunpack.c.l.b16 %v90
    %v347 = vunpack.c.l.b16 %v91
    %v348 = vunpack.c.l.b16 %v92
    %v349 = vunpack.c.l.b16 %v93
    %v350 = vunpack.c.l.b16 %v94
    %v351 = vunpack.c.l.b16 %v95
    %v352 = vunpack.c.l.b16 %v96
    %v353 = vunpack.c.l.b16 %v97
    %v354 = vunpack.c.l.b16 %v98
    %v355 = vunpack.c.l.b16 %v99
    %v356 = vunpack.c.l.b16 %v100
    %v357 = vunpack.c.l.b16 %v101
    %v358 = vunpack.c.l.b16 %v102
    %v359 = vunpack.c.l.b16 %v103
    %v360 = vunpack.c.l.b16 %v104
    %v361 = vunpack.c.l.b16 %v105
    %v362 = vunpack.c.l.b16 %v106
    %v363 = vunpack.c.l.b16 %v107
    %v364 = vunpack.c.l.b16 %v108
    %v365 = vunpack.c.l.b16 %v109
    %v366 = vunpack.c.l.b16 %v110
    %v367 = vunpack.c.l.b16 %v111
    %v368 = vunpack.c.l.b16 %v112
    %v369 = vunpack.c.l.b16 %v113
    %v370 = vunpack.c.l.b16 %v114
    %v371 = vunpack.c.l.b16 %v115
    %v372 = vunpack.c.l.b16 %v116
    %v373 = vunpack.c.l.b16 %v117
    %v374 = vunpack.c.l.b16 %v118
    %v375 = vunpack.c.l.b16 %v119
    %v376 = vunpack.c.l.b16 %v120
    %v377 = vunpack.c.l.b16 %v121
    %v378 = vunpack.c.l.b16 %v122
    %v379 = vunpack.c.l.b16 %v123
    %v380 = vunpack.c.l.b16 %v124
    %v381 = vunpack.c.l.b16 %v125
    %v382 = vunpack.c.l.b16 %v126
    %v383 = vunpack.c.l.b16 %v127
    %v384 = vunpack.c.l.b16 %v128
    %v385 = vunpack.c.l.b16 %v129
    %v386 = vunpack.c.l.b16 %v130
    %v387 = vunpack.c.l.b16 %v131
    %v388 = vunpack.c.l.b16 %v132
    %v389 = vunpack.c.l.b16 %v133
    %v390 = vunpack.c.l.b16 %v134
    %v391 = vunpack.c.l.b16 %v135
    %v392 = vunpack.c.l.b16 %v136
    %v393 = vunpack.c.l.b16 %v137
    %v394 = vunpack.c.l.b16 %v138
    %v395 = vunpack.c.l.b16 %v139
    %v396 = vunpack.c.l.b16 %v140
    %v397 = vunpack.c.l.b16 %v141
    %v398 = vunpack.c.l.b16 %v142
    %v399 = vunpack.c.l.b16 %v143
    %v400 = vunpack.c.l.b16 %v144
    %v401 = vunpack.c.l.b16 %v145
    %v402 = vunpack.c.l.b16 %v146
    %v403 = vunpack.c.l.b16 %v147
    %v404 = vunpack.c.l.b16 %v148
    %v405 = vunpack.c.l.b16 %v149
    %v406 = vunpack.c.l.b16 %v150
    %v407 = vunpack.c.l.b16 %v151
    %v408 = vunpack.c.l.b16 %v152
    %v409 = vunpack.c.l.b16 %v153
    %v410 = vunpack.c.l.b16 %v154
    %v411 = vunpack.c.l.b16 %v155
    %v412 = vunpack.c.l.b16 %v156
    %v413 = vunpack.c.l.b16 %v157
    %v414 = vunpack.c.l.b16 %v158
    %v415 = vunpack.c.l.b16 %v159
    %v416 = vunpack.c.l.b16 %v160
    %v417 = vunpack.c.l.b16 %v161
    %v418 = vunpack.c.l.b16 %v162
    %v419 = vunpack.c.l.b16 %v163
    %v420 = vunpack.c.l.b16 %v164
    %v421 = vunpack.c.l.b16 %v165
    %v422 = vunpack.c.l.b16 %v166
    %v423 = vunpack.c.l.b16 %v167
    %v424 = vunpack.c.l.b16 %v168
    %v425 = vunpack.c.l.b16 %v169
    %v426 = vunpack.c.l.b16 %v170
    %v427 = vunpack.c.l.b16 %v171
    %v428 = vunpack.c.l.b16 %v172
    %v429 = vunpack.c.l.b16 %v173
    %v430 = vunpack.c.l.b16 %v174
    %v431 = vunpack.c.l.b16 %v175
    %v432 = vunpack.c.l.b16 %v176
    %v433 = vunpack.c.l.b16 %v177
    %v434 = vunpack.c.l.b16 %v178
    %v435 = vunpack.c.l.b16 %v179
    %v436 = vunpack.c.l.b16 %v180
    %v437 = vunpack.c.l.b16 %v181
    %v438 = vunpack.c.l.b16 %v182
    %v439 = vunpack.c.l.b16 %v183
    %v440 = vunpack.c.l.b16 %v184
    %v441 = vpack.c.b16 %v314, %v313
    %v442 = vpack.c.b16 %v316, %v315
    %v443 = vpack.c.b16 %v318, %v317
    %v444 = vpack.c.b16 %v320, %v319
    %v445 = vpack.c.b16 %v322, %v321
    %v446 = vpack.c.b16 %v324, %v323
    %v447 = vpack.c.b16 %v326, %v325
    %v448 = vpack.c.b16 %v328, %v327
    %v449 = vpack.c.b16 %v330, %v329
    %v450 = vpack.c.b16 %v332, %v331
    %v451 = vpack.c.b16 %v334, %v333
    %v452 = vpack.c.b16 %v336, %v335
    %v453 = vpack.c.b16 %v338, %v337
    %v454 = vpack.c.b16 %v340, %v339
    %v455 = vpack.c.b16 %v342, %v341
    %v456 = vpack.c.b16 %v344, %v343
    %v457 = vpack.c.b16 %v346, %v345
    %v458 = vpack.c.b16 %v348, %v347
    %v459 = vpack.c.b16 %v350, %v349
    %v460 = vpack.c.b16 %v352, %v351
    %v461 = vpack.c.b16 %v354, %v353
    %v462 = vpack.c.b16 %v356, %v355
    %v463 = vpack.c.b16 %v358, %v357
    %v464 = vpack.c.b16 %v360, %v359
    %v465 = vpack.c.b16 %v362, %v361
    %v466 = vpack.c.b16 %v364, %v363
    %v467 = vpack.c.b16 %v366, %v365
    %v468 = vpack.c.b16 %v368, %v367
    %v469 = vpack.c.b16 %v370, %v369
    %v470 = vpack.c.b16 %v372, %v371
    %v471 = vpack.c.b16 %v374, %v373
    %v472 = vpack.c.b16 %v376, %v375
    %v473 = vpack.c.b16 %v378, %v377
    %v474 = vpack.c.b16 %v380, %v379
    %v475 = vpack.c.b16 %v382, %v381
    %v476 = vpack.c.b16 %v384, %v383
    %v477 = vpack.c.b16 %v386, %v385
    %v478 = vpack.c.b16 %v388, %v387
    %v479 = vpack.c.b16 %v390, %v389
    %v480 = vpack.c.b16 %v392, %v391
    %v481 = vpack.c.b16 %v394, %v393
    %v482 = vpack.c.b16 %v396, %v395
    %v483 = vpack.c.b16 %v398, %v397
    %v484 = vpack.c.b16 %v400, %v399
    %v485 = vpack.c.b16 %v402, %v401
    %v486 = vpack.c.b16 %v404, %v403
    %v487 = vpack.c.b16 %v406, %v405
    %v488 = vpack.c.b16 %v408, %v407
    %v489 = vpack.c.b16 %v410, %v409
    %v490 = vpack.c.b16 %v412, %v411
    %v491 = vpack.c.b16 %v414, %v413
    %v492 = vpack.c.b16 %v416, %v415
    %v493 = vpack.c.b16 %v418, %v417
    %v494 = vpack.c.b16 %v420, %v419
    %v495 = vpack.c.b16 %v422, %v421
    %v496 = vpack.c.b16 %v424, %v423
    %v497 = vpack.c.b16 %v426, %v425
    %v498 = vpack.c.b16 %v428, %v427
    %v499 = vpack.c.b16 %v430, %v429
    %v500 = vpack.c.b16 %v432, %v431
    %v501 = vpack.c.b16 %v434, %v433
    %v502 = vpack.c.b16 %v436, %v435
    %v503 = vpack.c.b16 %v438, %v437
    %v504 = vpack.c.b16 %v440, %v439
    %569 = vmatpush.bf16.msra.mxu0 %v448
    %570 = vmatpush.bf16.msra.mxu0 %v447
    %571 = vmatpush.bf16.msra.mxu0 %v446
    %572 = vmatpush.bf16.msra.mxu0 %v445
    %573 = vmatpush.bf16.msra.mxu0 %v444
    %574 = vmatpush.bf16.msra.mxu0 %v443
    %575 = vmatpush.bf16.msra.mxu0 %v442
    %576 = vmatpush.bf16.msra.mxu0 %v441
    %577 = vmatmul.bf16.gmra.mxu0 %v49
    %v578 = vpop.f32.mrf.mxu0
    %v579 = vadd.f32 0.0, %v578
    %v580 = vpop.f32.mrf.mxu0
    %581 = vdwg.mxu0
    %582 = vmatpush.bf16.msra.mxu0 %v456
    %583 = vmatpush.bf16.msra.mxu0 %v455
    %584 = vmatpush.bf16.msra.mxu0 %v454
    %585 = vmatpush.bf16.msra.mxu0 %v453
    %586 = vmatpush.bf16.msra.mxu0 %v452
    %587 = vmatpush.bf16.msra.mxu0 %v451
    %588 = vmatpush.bf16.msra.mxu0 %v450
    %589 = vmatpush.bf16.msra.mxu0 %v449
    %590 = vmatmul.bf16.gmra.mxu0 %v50
    %v591 = vpop.f32.mrf.mxu0
    %v592 = vadd.f32 %v579, %v591
    %v593 = vpop.f32.mrf.mxu0
    %594 = vdwg.mxu0
    %595 = vmatpush.bf16.msra.mxu0 %v464
    %596 = vmatpush.bf16.msra.mxu0 %v463
    %597 = vmatpush.bf16.msra.mxu0 %v462
    %598 = vmatpush.bf16.msra.mxu0 %v461
    %599 = vmatpush.bf16.msra.mxu0 %v460
    %600 = vmatpush.bf16.msra.mxu0 %v459
    %601 = vmatpush.bf16.msra.mxu0 %v458
    %602 = vmatpush.bf16.msra.mxu0 %v457
    %603 = vmatmul.bf16.gmra.mxu0 %v51
    %v604 = vpop.f32.mrf.mxu0
    %v605 = vadd.f32 %v592, %v604
    %v606 = vpop.f32.mrf.mxu0
    %607 = vdwg.mxu0
    %608 = vmatpush.bf16.msra.mxu0 %v472
    %609 = vmatpush.bf16.msra.mxu0 %v471
    %610 = vmatpush.bf16.msra.mxu0 %v470
    %611 = vmatpush.bf16.msra.mxu0 %v469
    %612 = vmatpush.bf16.msra.mxu0 %v468
    %613 = vmatpush.bf16.msra.mxu0 %v467
    %614 = vmatpush.bf16.msra.mxu0 %v466
    %615 = vmatpush.bf16.msra.mxu0 %v465
    %616 = vmatmul.bf16.gmra.mxu0 %v52
    %v617 = vpop.f32.mrf.mxu0
    %v618 = vadd.f32 %v605, %v617
    %v619 = vpop.f32.mrf.mxu0
    %620 = vdwg.mxu0
    %621 = vmatpush.bf16.msra.mxu0 %v480
    %622 = vmatpush.bf16.msra.mxu0 %v479
    %623 = vmatpush.bf16.msra.mxu0 %v478
    %624 = vmatpush.bf16.msra.mxu0 %v477
    %625 = vmatpush.bf16.msra.mxu0 %v476
    %626 = vmatpush.bf16.msra.mxu0 %v475
    %627 = vmatpush.bf16.msra.mxu0 %v474
    %628 = vmatpush.bf16.msra.mxu0 %v473
    %629 = vmatmul.bf16.gmra.mxu0 %v53
    %v630 = vpop.f32.mrf.mxu0
    %v631 = vadd.f32 %v618, %v630
    %v632 = vpop.f32.mrf.mxu0
    %633 = vdwg.mxu0
    %634 = vmatpush.bf16.msra.mxu0 %v488
    %635 = vmatpush.bf16.msra.mxu0 %v487
    %636 = vmatpush.bf16.msra.mxu0 %v486
    %637 = vmatpush.bf16.msra.mxu0 %v485
    %638 = vmatpush.bf16.msra.mxu0 %v484
    %639 = vmatpush.bf16.msra.mxu0 %v483
    %640 = vmatpush.bf16.msra.mxu0 %v482
    %641 = vmatpush.bf16.msra.mxu0 %v481
    %642 = vmatmul.bf16.gmra.mxu0 %v54
    %v643 = vpop.f32.mrf.mxu0
    %v644 = vadd.f32 %v631, %v643
    %v645 = vpop.f32.mrf.mxu0
    %646 = vdwg.mxu0
    %647 = vmatpush.bf16.msra.mxu0 %v496
    %648 = vmatpush.bf16.msra.mxu0 %v495
    %649 = vmatpush.bf16.msra.mxu0 %v494
    %650 = vmatpush.bf16.msra.mxu0 %v493
    %651 = vmatpush.bf16.msra.mxu0 %v492
    %652 = vmatpush.bf16.msra.mxu0 %v491
    %653 = vmatpush.bf16.msra.mxu0 %v490
    %654 = vmatpush.bf16.msra.mxu0 %v489
    %655 = vmatmul.bf16.gmra.mxu0 %v55
    %v656 = vpop.f32.mrf.mxu0
    %v657 = vadd.f32 %v644, %v656
    %v658 = vpop.f32.mrf.mxu0
    %659 = vdwg.mxu0
    %660 = vmatpush.bf16.msra.mxu0 %v504
    %661 = vmatpush.bf16.msra.mxu0 %v503
    %662 = vmatpush.bf16.msra.mxu0 %v502
    %663 = vmatpush.bf16.msra.mxu0 %v501
    %664 = vmatpush.bf16.msra.mxu0 %v500
    %665 = vmatpush.bf16.msra.mxu0 %v499
    %666 = vmatpush.bf16.msra.mxu0 %v498
    %667 = vmatpush.bf16.msra.mxu0 %v497
    %668 = vmatmul.bf16.gmra.mxu0 %v56
    %v669 = vpop.f32.mrf.mxu0
    %v670 = vadd.f32 %v657, %v669
    %v671 = vpop.f32.mrf.mxu0
    %672 = vdwg.mxu0
    %v673 = vadd.f32 %v25, %v670
    %vm674 = vcmask 254976
    %675 = vst.msk [vmem:[#allocation2] sm:$0x3] %vm674, %v673
    // Predicated region
    $region18: #{tpu_custom_call.1} parent=1 // pred_check
      _
    $region19: #{tpu_custom_call.1} parent=1 // pred_check_branch
      %677 = sbr.rel (0) target = $region21
    $region20: #{tpu_custom_call.1} parent=1 // pred_region
      %679 = vsyncadd [#allocation3], 0
      %s681 = sshll.u32 [#allocation2], 4
      %s682 = int_to_ptr.vmem [resolvable:$true] %s681
      %s683 = sshll.u32 %s3, 4
      %s684 = int_to_ptr.hbm [resolvable:$true] %s683
      %686 = dma.vmem_to_hbm [thread:$0]  %s682, 32, %s684, [#allocation3]
    $region21: #{tpu_custom_call.1} parent=1 // pred_fallthru
      _
    // Predicated region
    $region22: #{tpu_custom_call.1} parent=1 // pred_check
      _
    $region23: #{tpu_custom_call.1} parent=1 // pred_check_branch
      %688 = sbr.rel (0) target = $region25
    $region24: #{tpu_custom_call.1} parent=1 // pred_region
      %690 = dma.done [#allocation3], 32
    $region25: #{tpu_custom_call.1} parent=1 // pred_fallthru
      _
    %691 = vsyncpa [#allocation3], 1

</llo_original>
